<compile_context>
chip_gen: v7x
topology: tpu7x:2x2x1
jax: 0.10.0
libtpu: 0.0.40
codegen_flags: <defaults>
</compile_context>

<pallas_src>
import functools

import jax
import jax.numpy as jnp
from jax.experimental import pallas as pl
from jax.experimental.pallas import tpu as pltpu

_LANES = 128
_SUBLANES = 8


def _round_up(a, b):
    return -(-a // b) * b


def _mcc_partial_kernel(x_ref, t_ref, pt_ref, sp_ref, st_ref, *,
                        nblocks, tail_rows, guard_overrun):
    """Accumulates per-split (8,128) partial sums of p*t, p and t."""
    j = pl.program_id(1)
    steps = pl.num_programs(1)
    block = pl.program_id(0) * steps + j          # global row-block index

    @pl.when(j == 0)
    def _init():
        pt_ref[...] = jnp.zeros_like(pt_ref)
        sp_ref[...] = jnp.zeros_like(sp_ref)
        st_ref[...] = jnp.zeros_like(st_ref)

    x = x_ref[...].astype(jnp.float32)            # [br, 128]
    t = t_ref[...].astype(jnp.float32)            # [br, 128]
    # sigmoid(x) = 0.5*(tanh(x/2)+1): single EUP transcendental, no divide.
    p = 0.5 * (jnp.tanh(0.5 * x) + 1.0)

    br = x.shape[0]                               # static, multiple of 8

    def _accumulate(pv, tv):
        # [br,128] -> [br//8, 8, 128] -> sum over the leading axis: pure
        # vreg-to-vreg VPU adds into resident (8,128) f32 accumulators.
        pt_ref[...] += jnp.sum((pv * tv).reshape(br // _SUBLANES, _SUBLANES, _LANES), axis=0)
        sp_ref[...] += jnp.sum(pv.reshape(br // _SUBLANES, _SUBLANES, _LANES), axis=0)
        st_ref[...] += jnp.sum(tv.reshape(br // _SUBLANES, _SUBLANES, _LANES), axis=0)

    if tail_rows is None:
        if guard_overrun:
            # A split may hold one duplicated (clamped) block when nblocks is
            # not divisible by num_splits: skip its contribution.
            @pl.when(block < nblocks)
            def _():
                _accumulate(p, t)
        else:
            _accumulate(p, t)
    else:
        @pl.when(block < nblocks - 1)
        def _():
            _accumulate(p, t)

        @pl.when(block == nblocks - 1)
        def _():
            # Only the single partial last block pays for masking: rows past
            # the real data are undefined in VMEM and must not contribute.
            rid = jax.lax.broadcasted_iota(jnp.int32, p.shape, 0)
            keep = rid < tail_rows
            _accumulate(jnp.where(keep, p, 0.0), jnp.where(keep, t, 0.0))


def _default_num_splits():
    # v7x has 2 TensorCores per chip; split the stream across them.  v5e/v6e
    # have a single TC where the extra grid axis is a no-op.
    try:
        kind = jax.devices()[0].device_kind.lower()
    except Exception:
        return 1
    return 2 if "v7" in kind else 1


def mcc_loss_with_logits(logits, targets, *, block_rows=4096, num_splits=None):
    """JAX/Pallas equivalent of MCCLosswithLogits.forward(logits, targets)."""
    logits = jnp.asarray(logits)
    targets = jnp.asarray(targets)
    if logits.shape != targets.shape:
        raise ValueError("logits and targets must have the same shape")

    n = int(logits.size)
    if n == 0:
        return jnp.float32(1.0)   # tp=tn=fp=fn=0 -> mcc = 0 -> loss = 1

    # Stream the flattened inputs as lane-dense [rows, 128] in native dtype.
    x = jnp.ravel(logits)
    t = jnp.ravel(targets)
    cols = _LANES
    rows = pl.cdiv(n, cols)

    # Sublane alignment demanded by dtype packing (f32:8, bf16/f16:16, 8-bit:32).
    sub = max(_SUBLANES,
              32 // min(x.dtype.itemsize, 4),
              32 // min(t.dtype.itemsize, 4))

    block_rows = _round_up(max(int(block_rows), sub), 32)
    if rows >= block_rows:
        br = block_rows           # large input: fixed tile, no row padding;
        rows_padded = rows        # partial last block masked in-kernel.
    else:
        br = _round_up(rows, sub)  # small input: one aligned block, tiny pad.
        rows_padded = br
    assert br % _SUBLANES == 0

    # Pad only when needed (skip entirely when n is already a multiple of 128
    # and large enough).  Padded logits get a large negative value so that
    # sigmoid(pad) == 0 exactly and padded targets are 0, hence padding
    # contributes nothing to any of the three running sums (no mask needed).
    pad_elems = rows_padded * cols - n
    if pad_elems:
        pad_logit = -16384.0 if jnp.issubdtype(x.dtype, jnp.floating) else -100
        x = jnp.pad(x, (0, pad_elems), constant_values=pad_logit)
        t = jnp.pad(t, (0, pad_elems), constant_values=0)
    x = x.reshape(rows_padded, cols)
    t = t.reshape(rows_padded, cols)

    nblocks = pl.cdiv(rows_padded, br)
    tail = rows_padded % br
    tail_rows = None if tail == 0 else tail

    if num_splits is None:
        num_splits = _default_num_splits()
    num_splits = max(1, min(int(num_splits), nblocks))
    steps = pl.cdiv(nblocks, num_splits)
    guard_overrun = (num_splits * steps != nblocks)

    if guard_overrun:
        def in_index(s, j):
            return (jnp.minimum(s * steps + j, nblocks - 1), 0)
    else:
        def in_index(s, j):
            return (s * steps + j, 0)

    def out_index(s, j):
        return (s, 0)

    kernel = functools.partial(
        _mcc_partial_kernel, nblocks=nblocks, tail_rows=tail_rows,
        guard_overrun=guard_overrun)

    part_shape = jax.ShapeDtypeStruct((num_splits * _SUBLANES, _LANES), jnp.float32)
    part_spec = pl.BlockSpec((_SUBLANES, _LANES), out_index)

    pt_part, sp_part, st_part = pl.pallas_call(
        kernel,
        out_shape=(part_shape, part_shape, part_shape),
        grid_spec=pltpu.PrefetchScalarGridSpec(
            num_scalar_prefetch=0,
            grid=(num_splits, steps),
            in_specs=[
                pl.BlockSpec((br, cols), in_index),
                pl.BlockSpec((br, cols), in_index),
            ],
            out_specs=[part_spec, part_spec, part_spec],
        ),
        compiler_params=pltpu.CompilerParams(
            dimension_semantics=("parallel", "arbitrary"),
        ),
        cost_estimate=pl.CostEstimate(
            flops=8 * n,
            transcendentals=n,
            bytes_accessed=(x.size * x.dtype.itemsize
                            + t.size * t.dtype.itemsize
                            + 3 * num_splits * _SUBLANES * _LANES * 4),
        ),
    )(x, t)

    # Final cross-lane reduction + confusion-matrix algebra + MCC (tiny; done
    # once on (splits*8,128) partials).  TN/FP/FN follow from the static count.
    tp = jnp.sum(pt_part)              # sum(p * t)
    sp = jnp.sum(sp_part)              # sum(p)
    st = jnp.sum(st_part)              # sum(t)
    total = jnp.float32(n)
    fp = sp - tp                       # sum(p * (1 - t))
    fn = st - tp                       # sum((1 - p) * t)
    tn = total - sp - st + tp          # sum((1 - p) * (1 - t))
    numerator = tp * tn - fp * fn
    denominator = jnp.sqrt((tp + fp) * (tp + fn) * (tn + fp) * (tn + fn))
    mcc = numerator / (denominator + 1.0)
    return 1.0 - mcc


def _mcc_loss_ref(logits, targets):
    """Pure-JAX reference mirroring the PyTorch forward."""
    p = jax.nn.sigmoid(logits.astype(jnp.float32))
    t = targets.astype(jnp.float32)
    tp = jnp.sum(p * t)
    tn = jnp.sum((1.0 - p) * (1.0 - t))
    fp = jnp.sum(p * (1.0 - t))
    fn = jnp.sum((1.0 - p) * t)
    numerator = tp * tn - fp * fn
    denominator = jnp.sqrt((tp + fp) * (tp + fn) * (tn + fp) * (tn + fn))
    mcc = numerator / (denominator + 1.0)
    return 1.0 - mcc


if __name__ == "__main__":
    key = jax.random.PRNGKey(0)
    k_logit, k_cls = jax.random.split(key)

    # Small segmentation-style shapes: batch=2, classes=4, spatial 16x16.
    batch, n_classes, h, w = 2, 4, 16, 16
    logits = jax.random.normal(k_logit, (batch, n_classes, h, w),
                               dtype=jnp.float32)
    cls_map = jax.random.randint(k_cls, (batch, h, w), 0, n_classes,
                                 dtype=jnp.int32)
    targets = jax.nn.one_hot(cls_map, n_classes, axis=1,
                             dtype=jnp.float32)          # [2, 4, 16, 16]

    loss = mcc_loss_with_logits(logits, targets)
    loss = jax.block_until_ready(loss)

    ref = _mcc_loss_ref(logits, targets)
    assert jnp.allclose(loss, ref, rtol=1e-3, atol=1e-3), (loss, ref)
    print("KERNEL_OK")
</pallas_src>

<mosaic_0001>
module attributes {stable_mosaic.version = 11 : i64} {
  func.func @_mcc_partial_kernel(%arg0: i32, %arg1: i32, %arg2: memref<16x128xf32, #tpu.memory_space<vmem>>, %arg3: memref<16x128xf32, #tpu.memory_space<vmem>>, %arg4: memref<8x128xf32, #tpu.memory_space<vmem>>, %arg5: memref<8x128xf32, #tpu.memory_space<vmem>>, %arg6: memref<8x128xf32, #tpu.memory_space<vmem>>) attributes {dimension_semantics = [#tpu.dimension_semantics<parallel>, #tpu.dimension_semantics<arbitrary>], iteration_bounds = array<i64: 1, 1>, scalar_prefetch = 0 : i64, scratch_operands = 0 : i64, tpu.core_type = #tpu.core_type<tc>, window_params = [{transform_indices = @transform_0, window_bounds = array<i64: 16, 128>}, {transform_indices = @transform_1, window_bounds = array<i64: 16, 128>}, {transform_indices = @transform_2, window_bounds = array<i64: 8, 128>}, {transform_indices = @transform_3, window_bounds = array<i64: 8, 128>}, {transform_indices = @transform_4, window_bounds = array<i64: 8, 128>}]} {
    %c0_i32 = arith.constant 0 : i32
    %0 = arith.cmpi eq, %arg1, %c0_i32 : i32
    %1 = arith.extui %0 : i1 to i32
    %c0_i32_0 = arith.constant 0 : i32
    %2 = arith.cmpi ne, %1, %c0_i32_0 : i32
    scf.if %2 {
      %cst_21 = arith.constant 0.000000e+00 : f32
      %28 = vector.broadcast %cst_21 : f32 to vector<8x128xf32>
      %c0_22 = arith.constant 0 : index
      %c0_23 = arith.constant 0 : index
      %29 = vector.load %arg4[%c0_22, %c0_23] : memref<8x128xf32, #tpu.memory_space<vmem>>, vector<8x128xf32>
      tpu.vector_store %arg4[%c0_22, %c0_23], %28 {strides = array<i32>} : memref<8x128xf32, #tpu.memory_space<vmem>>, vector<8x128xf32>,
      %cst_24 = arith.constant 0.000000e+00 : f32
      %30 = vector.broadcast %cst_24 : f32 to vector<8x128xf32>
      %c0_25 = arith.constant 0 : index
      %c0_26 = arith.constant 0 : index
      %31 = vector.load %arg5[%c0_25, %c0_26] : memref<8x128xf32, #tpu.memory_space<vmem>>, vector<8x128xf32>
      tpu.vector_store %arg5[%c0_25, %c0_26], %30 {strides = array<i32>} : memref<8x128xf32, #tpu.memory_space<vmem>>, vector<8x128xf32>,
      %cst_27 = arith.constant 0.000000e+00 : f32
      %32 = vector.broadcast %cst_27 : f32 to vector<8x128xf32>
      %c0_28 = arith.constant 0 : index
      %c0_29 = arith.constant 0 : index
      %33 = vector.load %arg6[%c0_28, %c0_29] : memref<8x128xf32, #tpu.memory_space<vmem>>, vector<8x128xf32>
      tpu.vector_store %arg6[%c0_28, %c0_29], %32 {strides = array<i32>} : memref<8x128xf32, #tpu.memory_space<vmem>>, vector<8x128xf32>,
    } else {
    }
    %c0 = arith.constant 0 : index
    %c0_1 = arith.constant 0 : index
    %3 = vector.load %arg2[%c0, %c0_1] : memref<16x128xf32, #tpu.memory_space<vmem>>, vector<16x128xf32>
    %c0_2 = arith.constant 0 : index
    %c0_3 = arith.constant 0 : index
    %4 = vector.load %arg3[%c0_2, %c0_3] : memref<16x128xf32, #tpu.memory_space<vmem>>, vector<16x128xf32>
    %cst = arith.constant 5.000000e-01 : f32
    %5 = vector.broadcast %cst : f32 to vector<16x128xf32>
    %6 = arith.mulf %5, %3 : vector<16x128xf32>
    %7 = math.tanh %6 : vector<16x128xf32>
    %cst_4 = arith.constant 1.000000e+00 : f32
    %8 = vector.broadcast %cst_4 : f32 to vector<16x128xf32>
    %9 = arith.addf %7, %8 : vector<16x128xf32>
    %cst_5 = arith.constant 5.000000e-01 : f32
    %10 = vector.broadcast %cst_5 : f32 to vector<16x128xf32>
    %11 = arith.mulf %10, %9 : vector<16x128xf32>
    %c0_6 = arith.constant 0 : index
    %c0_7 = arith.constant 0 : index
    %12 = vector.load %arg4[%c0_6, %c0_7] : memref<8x128xf32, #tpu.memory_space<vmem>>, vector<8x128xf32>
    %13 = arith.mulf %11, %4 : vector<16x128xf32>
    %14 = vector.shape_cast %13 : vector<16x128xf32> to vector<2x8x128xf32>
    %cst_8 = arith.constant dense<0.000000e+00> : vector<8x128xf32>
    %15 = vector.multi_reduction <add>, %14, %cst_8 [0] : vector<2x8x128xf32> to vector<8x128xf32>
    %16 = arith.addf %12, %15 : vector<8x128xf32>
    %c0_9 = arith.constant 0 : index
    %c0_10 = arith.constant 0 : index
    %17 = vector.load %arg4[%c0_9, %c0_10] : memref<8x128xf32, #tpu.memory_space<vmem>>, vector<8x128xf32>
    tpu.vector_store %arg4[%c0_9, %c0_10], %16 {strides = array<i32>} : memref<8x128xf32, #tpu.memory_space<vmem>>, vector<8x128xf32>,
    %c0_11 = arith.constant 0 : index
    %c0_12 = arith.constant 0 : index
    %18 = vector.load %arg5[%c0_11, %c0_12] : memref<8x128xf32, #tpu.memory_space<vmem>>, vector<8x128xf32>
    %19 = vector.shape_cast %11 : vector<16x128xf32> to vector<2x8x128xf32>
    %cst_13 = arith.constant dense<0.000000e+00> : vector<8x128xf32>
    %20 = vector.multi_reduction <add>, %19, %cst_13 [0] : vector<2x8x128xf32> to vector<8x128xf32>
    %21 = arith.addf %18, %20 : vector<8x128xf32>
    %c0_14 = arith.constant 0 : index
    %c0_15 = arith.constant 0 : index
    %22 = vector.load %arg5[%c0_14, %c0_15] : memref<8x128xf32, #tpu.memory_space<vmem>>, vector<8x128xf32>
    tpu.vector_store %arg5[%c0_14, %c0_15], %21 {strides = array<i32>} : memref<8x128xf32, #tpu.memory_space<vmem>>, vector<8x128xf32>,
    %c0_16 = arith.constant 0 : index
    %c0_17 = arith.constant 0 : index
    %23 = vector.load %arg6[%c0_16, %c0_17] : memref<8x128xf32, #tpu.memory_space<vmem>>, vector<8x128xf32>
    %24 = vector.shape_cast %4 : vector<16x128xf32> to vector<2x8x128xf32>
    %cst_18 = arith.constant dense<0.000000e+00> : vector<8x128xf32>
    %25 = vector.multi_reduction <add>, %24, %cst_18 [0] : vector<2x8x128xf32> to vector<8x128xf32>
    %26 = arith.addf %23, %25 : vector<8x128xf32>
    %c0_19 = arith.constant 0 : index
    %c0_20 = arith.constant 0 : index
    %27 = vector.load %arg6[%c0_19, %c0_20] : memref<8x128xf32, #tpu.memory_space<vmem>>, vector<8x128xf32>
    tpu.vector_store %arg6[%c0_19, %c0_20], %26 {strides = array<i32>} : memref<8x128xf32, #tpu.memory_space<vmem>>, vector<8x128xf32>,
    return
  }
  func.func @transform_0(%arg0: i32, %arg1: i32) -> (i32, i32) {
    %c1_i32 = arith.constant 1 : i32
    %0 = arith.muli %arg0, %c1_i32 : i32
    %1 = arith.addi %0, %arg1 : i32
    %c0_i32 = arith.constant 0 : i32
    %c0_i32_0 = arith.constant 0 : i32
    return %1, %c0_i32 : i32, i32
  }
  func.func @transform_1(%arg0: i32, %arg1: i32) -> (i32, i32) {
    %c1_i32 = arith.constant 1 : i32
    %0 = arith.muli %arg0, %c1_i32 : i32
    %1 = arith.addi %0, %arg1 : i32
    %c0_i32 = arith.constant 0 : i32
    %c0_i32_0 = arith.constant 0 : i32
    return %1, %c0_i32 : i32, i32
  }
  func.func @transform_2(%arg0: i32, %arg1: i32) -> (i32, i32) {
    %c0_i32 = arith.constant 0 : i32
    %c0_i32_0 = arith.constant 0 : i32
    return %arg0, %c0_i32 : i32, i32
  }
  func.func @transform_3(%arg0: i32, %arg1: i32) -> (i32, i32) {
    %c0_i32 = arith.constant 0 : i32
    %c0_i32_0 = arith.constant 0 : i32
    return %arg0, %c0_i32 : i32, i32
  }
  func.func @transform_4(%arg0: i32, %arg1: i32) -> (i32, i32) {
    %c0_i32 = arith.constant 0 : i32
    %c0_i32_0 = arith.constant 0 : i32
    return %arg0, %c0_i32 : i32, i32
  }
}

</mosaic_0001>

<llo_original>
// kernel: tpu_custom_call.1
$region0: #{tpu_custom_call.1}
  #allocation0 [shape = 'u32[]', space=smem, size = 0x4, offset = 0x4, fixed_abs, tag = 'smem constant byte address 0x4 - core index']
  #allocation1 [shape = 'u32[144,128]{1,0:T(1,128)}', space=vmem, size = 0x12000, scoped, tag = 'internal scratch']
  %s0 = inlined_call_operand.hbm [shape: f32[16,128], index: 0, kind: input, shape index: {}]
  %s1 = inlined_call_operand.hbm [shape: f32[16,128], index: 1, kind: input, shape index: {}]
  %s2 = inlined_call_operand.hbm [shape: f32[8,128], index: 2, kind: output, shape index: {0}]
  %s3 = inlined_call_operand.hbm [shape: f32[8,128], index: 3, kind: output, shape index: {1}]
  %s4 = inlined_call_operand.hbm [shape: f32[8,128], index: 4, kind: output, shape index: {2}]
  %5 = xla_tuple %s2, %s3, %s4
  %s6 = sld [smem:[#allocation0]]
  $region46: #{tpu_custom_call.1} parent=0
    _
  %s8 = ssub.s32 1, %s6
  %s9 = scalar_select 0, %s8, %s6
  $region1: #{tpu_custom_call.1} parent=0
    #allocation2 [shape = 'u8[8192]{0}', space=vmem, size = 0x2000, scoped, tag = 'input window, operand 0, single buffered']
    #allocation3 [shape = 's32[1]{0}', space=sflag, size = 0x4, scoped, tag = 'scoped memory for tpu_custom_call.1']
    #allocation4 [shape = 's32[1]{0}', space=sflag, size = 0x4, scoped, tag = 'scoped memory for tpu_custom_call.1']
    #allocation5 [shape = 'u8[8192]{0}', space=vmem, size = 0x2000, scoped, tag = 'input window, operand 1, single buffered']
    #allocation6 [shape = 's32[1]{0}', space=sflag, size = 0x4, scoped, tag = 'scoped memory for tpu_custom_call.1']
    #allocation7 [shape = 'u8[4096]{0}', space=vmem, size = 0x1000, scoped, tag = 'output window, operand 0, single buffered']
    #allocation8 [shape = 'u8[4096]{0}', space=vmem, size = 0x1000, scoped, tag = 'output window, operand 1, single buffered']
    #allocation9 [shape = 's32[1]{0}', space=sflag, size = 0x4, scoped, tag = 'scoped memory for tpu_custom_call.1']
    #allocation10 [shape = 'u8[4096]{0}', space=vmem, size = 0x1000, scoped, tag = 'output window, operand 2, single buffered']
    %10 = vsyncpa [#allocation3], 0
    %11 = vsyncpa [#allocation6], 0
    %12 = vsyncpa [#allocation4], 0
    %13 = vsyncpa [#allocation9], 0
    // Predicated region
    $region2: #{tpu_custom_call.1} parent=1 // pred_check
      _
    $region3: #{tpu_custom_call.1} parent=1 // pred_check_branch
      %15 = sbr.rel (0) target = $region5
    $region4: #{tpu_custom_call.1} parent=1 // pred_region
      %s16 = sadd.s32 0, 0
      %s17 = smul.u32 2, %s16
      %s19 = ssub.s32 256, 256
      %20 = vsyncadd [#allocation3], %s19
      %s21 = smul.addr %s17, 128
      %s22 = scalar_lea.hbm %s0, %s21
      %s23 = sshll.u32 [#allocation2], 4
      %s24 = int_to_ptr.vmem [resolvable:$true] %s23
      %29 = dma.hbm_to_vmem [thread:$0]  %s22, 256, %s24, [#allocation3], 128, 128, 8
    $region5: #{tpu_custom_call.1} parent=1 // pred_fallthru
      _
    // Predicated region
    $region6: #{tpu_custom_call.1} parent=1 // pred_check
      _
    $region7: #{tpu_custom_call.1} parent=1 // pred_check_branch
      %31 = sbr.rel (0) target = $region9
    $region8: #{tpu_custom_call.1} parent=1 // pred_region
      %s32 = sadd.s32 0, 0
      %s33 = smul.u32 2, %s32
      %s35 = ssub.s32 256, 256
      %36 = vsyncadd [#allocation6], %s35
      %s37 = smul.addr %s33, 128
      %s38 = scalar_lea.hbm %s1, %s37
      %s39 = sshll.u32 [#allocation5], 4
      %s40 = int_to_ptr.vmem [resolvable:$true] %s39
      %45 = dma.hbm_to_vmem [thread:$0]  %s38, 256, %s40, [#allocation6], 128, 128, 8
    $region9: #{tpu_custom_call.1} parent=1 // pred_fallthru
      _
    // Predicated region
    $region10: #{tpu_custom_call.1} parent=1 // pred_check
      _
    $region11: #{tpu_custom_call.1} parent=1 // pred_check_branch
      %47 = sbr.rel (0) target = $region13
    $region12: #{tpu_custom_call.1} parent=1 // pred_region
      %48 = dma.done [#allocation3], 256
    $region13: #{tpu_custom_call.1} parent=1 // pred_fallthru
      _
    // Predicated region
    $region14: #{tpu_custom_call.1} parent=1 // pred_check
      _
    $region15: #{tpu_custom_call.1} parent=1 // pred_check_branch
      %50 = sbr.rel (0) target = $region17
    $region16: #{tpu_custom_call.1} parent=1 // pred_region
      %51 = dma.done [#allocation6], 256
    $region17: #{tpu_custom_call.1} parent=1 // pred_fallthru
      _
    %s52 = sadd.s32 0, 0
    %s53 = smul.u32 2, %s52
    %s54 = sadd.s32 0, 0
    %s55 = smul.u32 2, %s54
    %p56 = scmp.eq.s32.totalorder 0, 0
    // Predicated region
    $region18: #{tpu_custom_call.1} parent=1 // pred_check
      %p57 = pneg %p56
    $region19: #{tpu_custom_call.1} parent=1 // pred_check_branch
      %59 = sbr.rel (%p57) target = $region21
    $region20: #{tpu_custom_call.1} parent=1 // pred_region
      %60 = vst [vmem:[#allocation7] sm:$0xff] 0.0
      %61 = vst [vmem:[#allocation8] sm:$0xff] 0.0
      %62 = vst [vmem:[#allocation10] sm:$0xff] 0.0
    $region21: #{tpu_custom_call.1} parent=1 // pred_fallthru
      _
    %v63 = vld [vmem:[#allocation2] sm:$0xff]
    %v64 = vld [vmem:[#allocation2 + $0x8] sm:$0xff]
    %v65 = vld [vmem:[#allocation5] sm:$0xff]
    %v66 = vld [vmem:[#allocation5 + $0x8] sm:$0xff]
    %v67 = vmul.f32 %v63, 0.5
    %v68 = vmul.f32 %v64, 0.5
    %v69 = vtanh.pop %v67
    %v70 = vtanh.pop %v68
    %v71 = vadd.f32 %v69, 1.0
    %v72 = vadd.f32 %v70, 1.0
    %v73 = vmul.f32 %v71, 0.5
    %v74 = vmul.f32 %v72, 0.5
    %v75 = vld [vmem:[#allocation7] sm:$0xff]
    %v76 = vmul.f32 %v73, %v65
    %v77 = vmul.f32 %v74, %v66
    %v78 = vadd.f32 %v76, %v77
    %v79 = vadd.f32 %v75, %v78
    %80 = vst [vmem:[#allocation7] sm:$0xff] %v79
    %v81 = vld [vmem:[#allocation8] sm:$0xff]
    %v82 = vadd.f32 %v73, %v74
    %v83 = vadd.f32 %v81, %v82
    %84 = vst [vmem:[#allocation8] sm:$0xff] %v83
    %v85 = vld [vmem:[#allocation10] sm:$0xff]
    %v86 = vadd.f32 %v65, %v66
    %v87 = vadd.f32 %v85, %v86
    %88 = vst [vmem:[#allocation10] sm:$0xff] %v87
    // Predicated region
    $region22: #{tpu_custom_call.1} parent=1 // pred_check
      _
    $region23: #{tpu_custom_call.1} parent=1 // pred_check_branch
      %90 = sbr.rel (0) target = $region25
    $region24: #{tpu_custom_call.1} parent=1 // pred_region
      %s92 = ssub.s32 128, 128
      %93 = vsyncadd [#allocation4], %s92
      %s95 = sshll.u32 [#allocation7], 4
      %s96 = int_to_ptr.vmem [resolvable:$true] %s95
      %98 = dma.vmem_to_hbm [thread:$0]  %s96, 128, %s2, [#allocation4]
    $region25: #{tpu_custom_call.1} parent=1 // pred_fallthru
      _
    // Predicated region
    $region26: #{tpu_custom_call.1} parent=1 // pred_check
      _
    $region27: #{tpu_custom_call.1} parent=1 // pred_check_branch
      %100 = sbr.rel (0) target = $region29
    $region28: #{tpu_custom_call.1} parent=1 // pred_region
      %s102 = ssub.s32 128, 128
      %103 = vsyncadd [#allocation9], %s102
      %s105 = sshll.u32 [#allocation8], 4
      %s106 = int_to_ptr.vmem [resolvable:$true] %s105
      %108 = dma.vmem_to_hbm [thread:$0]  %s106, 128, %s3, [#allocation9]
    $region29: #{tpu_custom_call.1} parent=1 // pred_fallthru
      _
    // Predicated region
    $region30: #{tpu_custom_call.1} parent=1 // pred_check
      _
    $region31: #{tpu_custom_call.1} parent=1 // pred_check_branch
      %110 = sbr.rel (0) target = $region33
    $region32: #{tpu_custom_call.1} parent=1 // pred_region
      %s112 = ssub.s32 128, 128
      %113 = vsyncadd [#allocation9], %s112
      %s115 = sshll.u32 [#allocation10], 4
      %s116 = int_to_ptr.vmem [resolvable:$true] %s115
      %118 = dma.vmem_to_hbm [thread:$0]  %s116, 128, %s4, [#allocation9]
    $region33: #{tpu_custom_call.1} parent=1 // pred_fallthru
      _
    // Predicated region
    $region34: #{tpu_custom_call.1} parent=1 // pred_check
      _
    $region35: #{tpu_custom_call.1} parent=1 // pred_check_branch
      %120 = sbr.rel (0) target = $region37
    $region36: #{tpu_custom_call.1} parent=1 // pred_region
      %121 = dma.done [#allocation4], 128
    $region37: #{tpu_custom_call.1} parent=1 // pred_fallthru
      _
    // Predicated region
    $region38: #{tpu_custom_call.1} parent=1 // pred_check
      _
    $region39: #{tpu_custom_call.1} parent=1 // pred_check_branch
      %123 = sbr.rel (0) target = $region41
    $region40: #{tpu_custom_call.1} parent=1 // pred_region
      %124 = dma.done [#allocation9], 128
    $region41: #{tpu_custom_call.1} parent=1 // pred_fallthru
      _
    // Predicated region
    $region42: #{tpu_custom_call.1} parent=1 // pred_check
      _
    $region43: #{tpu_custom_call.1} parent=1 // pred_check_branch
      %126 = sbr.rel (0) target = $region45
    $region44: #{tpu_custom_call.1} parent=1 // pred_region
      %127 = dma.done [#allocation9], 128
    $region45: #{tpu_custom_call.1} parent=1 // pred_fallthru
      _
    %128 = vsyncpa [#allocation3], 1
    %129 = vsyncpa [#allocation6], 1
    %130 = vsyncpa [#allocation4], 1
    %131 = vsyncpa [#allocation9], 1

</llo_original>
